<compile_context>
chip_gen: v7x
topology: tpu7x:2x2x1
jax: 0.10.0
libtpu: 0.0.40
codegen_flags: <defaults>
</compile_context>

<pallas_src>
import functools

import jax
import jax.numpy as jnp
from jax.experimental import pallas as pl
from jax.experimental.pallas import tpu as pltpu


# ----------------------------- budget helpers -------------------------------

def _round_up(x, m):
    return -(-x // m) * m


def _vmem_capacity_bytes():
    """Physical VMEM per TensorCore; conservative 64 MiB if unknown."""
    try:
        info = pltpu.get_tpu_info()
        for attr in ("vmem_capacity_bytes", "vmem_bytes", "vmem_size_bytes"):
            v = getattr(info, attr, None)
            if v:
                return int(v)
    except Exception:
        pass
    return 64 * 1024 * 1024


def _budget_config():
    """Per-generation scoped VMEM limit and target token tile."""
    cap = _vmem_capacity_bytes()
    big = cap >= 96 * 1024 * 1024          # v5e / v6e: 128 MiB;  v7x: 64 MiB
    vmem_limit = (100 if big else 48) * 1024 * 1024
    tm_target = 1024 if big else 512
    return vmem_limit, tm_target


def _working_set_bytes(tm, th, dim, wb, xb, ob):
    """Full per-step VMEM working set:
       double-buffered [gate|up] (dim,2*th) + down (th,dim) weight tiles,
       double-buffered x and out tiles, f32 accumulator, f32 gu/h temporaries."""
    weights = 6 * dim * th * wb                 # 2 * (dim*2th + th*dim)
    fixed = tm * dim * (2 * xb + 2 * ob + 4)    # x dbuf + out dbuf + f32 acc
    temps = 12 * tm * th                        # gu (tm,2th) f32 + h (tm,th) f32
    return weights + fixed + temps


def pick_hidden_tile(dim, hidden, *, compute_dtype=jnp.bfloat16,
                     x_dtype=jnp.float32, out_dtype=jnp.float32):
    """Hidden tile th, co-derived with the per-generation token tile so the
    whole working set fits the generation's VMEM budget."""
    vmem_limit, tm = _budget_config()
    budget = int(vmem_limit * 0.85)
    wb = jnp.dtype(compute_dtype).itemsize
    xb = jnp.dtype(x_dtype).itemsize
    ob = jnp.dtype(out_dtype).itemsize
    if hidden % 256 == 0:
        align = 256          # native 256x256 MXU tile on v6e/v7x
    elif hidden % 128 == 0:
        align = 128
    else:
        align = hidden       # tiny hidden: single full tile
    th = hidden
    while True:
        fixed = tm * dim * (2 * xb + 2 * ob + 4)
        per_th = 6 * dim * wb + 12 * tm
        avail = budget - fixed
        th = avail // per_th if avail > 0 else 0
        if th >= min(hidden, align) or tm <= 256:
            break
        tm //= 2
    th = int(min(th, hidden))
    if th < hidden:
        th = max(align, (th // align) * align)
        th = min(th, hidden)
    return max(int(th), 1)


# ------------------------------ weight prep ---------------------------------

def prepare_glu_mlp_weights(wg, wu, wd, *, th, compute_dtype=jnp.bfloat16):
    """One-time weight preparation (parameter-load time, NOT per call).

    wg, wu: (hidden, dim)  torch nn.Linear(dim, hidden) weight layout.
    wd:     (dim, hidden)  torch nn.Linear(hidden, dim) weight layout.

    Hidden is zero-padded to a multiple of th; padded columns/rows contribute 0.

    Returns:
      wgu: (gh, dim, 2*th)  per hidden-tile fused [gate | up] columns (in->out)
      wdt: (gh, th, dim)    per hidden-tile rows of down_proj^T
    """
    hidden, dim = wg.shape
    hidden_p = _round_up(hidden, th)
    if hidden_p != hidden:
        pad = hidden_p - hidden
        wg = jnp.pad(wg, ((0, pad), (0, 0)))
        wu = jnp.pad(wu, ((0, pad), (0, 0)))
        wd = jnp.pad(wd, ((0, 0), (0, pad)))
    gh = hidden_p // th
    wg_t = wg.T.reshape(dim, gh, th).transpose(1, 0, 2)          # (gh, dim, th)
    wu_t = wu.T.reshape(dim, gh, th).transpose(1, 0, 2)          # (gh, dim, th)
    wgu = jnp.concatenate([wg_t, wu_t], axis=-1).astype(compute_dtype)
    wdt = wd.T.reshape(gh, th, dim).astype(compute_dtype)
    return wgu, wdt


# -------------------------------- kernel ------------------------------------

def _glu_mlp_kernel(x_ref, wgu_ref, wd_ref, o_ref, *scratch, th):
    compute_dtype = wgu_ref.dtype
    # cast activations at the kernel boundary (no wrapper-side HBM round-trip)
    x = x_ref[...].astype(compute_dtype)                               # (tm, dim)
    # fused gate/up projection: single MXU pass over a (dim, 2*th) weight tile
    gu = jnp.dot(x, wgu_ref[...], preferred_element_type=jnp.float32)  # (tm, 2*th) f32
    gate = gu[:, :th]
    up = gu[:, th:]
    # SiLU + gating in f32 (v5e VPU/EUP have no bf16; accumulation stays f32)
    h = (gate * jax.nn.sigmoid(gate)) * up                             # (tm, th) f32
    part = jnp.dot(h.astype(compute_dtype), wd_ref[...],
                   preferred_element_type=jnp.float32)                 # (tm, dim) f32

    if not scratch:
        # gh == 1 fast path: single reduction step, no accumulator scratch
        o_ref[...] = part.astype(o_ref.dtype)
        return

    acc_ref, = scratch
    j = pl.program_id(1)

    @pl.when(j == 0)
    def _init():
        acc_ref[...] = part

    @pl.when(j > 0)
    def _accum():
        acc_ref[...] += part

    @pl.when(j == pl.num_programs(1) - 1)
    def _finalize():
        o_ref[...] = acc_ref[...].astype(o_ref.dtype)


# -------------------------------- wrapper ------------------------------------

def glu_mlp(x, wgu, wdt, *, tm=None, interpret=False):
    """x: (..., dim). wgu/wdt: outputs of prepare_glu_mlp_weights."""
    orig_shape = x.shape
    dim = orig_shape[-1]
    gh, _, two_th = wgu.shape
    th = two_th // 2
    hidden_p = gh * th
    compute_dtype = wgu.dtype
    out_dtype = x.dtype

    x2d = x.reshape(-1, dim)
    M = x2d.shape[0]
    M8 = _round_up(M, 8)

    vmem_limit, tm_target = _budget_config()
    budget = int(vmem_limit * 0.85)
    wb = jnp.dtype(compute_dtype).itemsize
    xb = jnp.dtype(x.dtype).itemsize
    ob = jnp.dtype(out_dtype).itemsize

    if tm is None:
        # largest token tile that, together with this th, fits the VMEM budget
        tm_cfg = tm_target
        while tm_cfg > 8 and _working_set_bytes(tm_cfg, th, dim, wb, xb, ob) > budget:
            tm_cfg //= 2
        if M8 <= tm_cfg:
            # all tokens fit one tile: split in two when big enough so both
            # megacore TensorCores get a token tile
            tm = _round_up(-(-M8 // 2), 8) if M8 >= 512 else M8
        else:
            tm = tm_cfg
    tm = max(8, _round_up(int(tm), 8))

    # pad token count UP to a multiple of tm (never shrink the tile to fit M)
    Mp = _round_up(M8, tm)
    if Mp != M:
        x2d = jnp.pad(x2d, ((0, Mp - M), (0, 0)))
    n_tok = Mp // tm

    cost = pl.CostEstimate(
        flops=6 * Mp * dim * hidden_p,                # gate + up + down matmuls
        transcendentals=Mp * hidden_p,                # sigmoid
        bytes_accessed=(Mp * dim * xb                 # x read once per token tile
                        + n_tok * 3 * dim * hidden_p * wb   # weights re-read per token tile
                        + Mp * dim * ob),             # output
    )

    scratch_shapes = [] if gh == 1 else [pltpu.VMEM((tm, dim), jnp.float32)]

    out = pl.pallas_call(
        functools.partial(_glu_mlp_kernel, th=th),
        out_shape=jax.ShapeDtypeStruct((Mp, dim), out_dtype),
        grid_spec=pltpu.PrefetchScalarGridSpec(
            num_scalar_prefetch=0,
            grid=(n_tok, gh),
            in_specs=[
                pl.BlockSpec((tm, dim), lambda i, j: (i, 0)),               # x tile
                pl.BlockSpec((None, dim, two_th), lambda i, j: (j, 0, 0)),  # [gate|up] tile
                pl.BlockSpec((None, th, dim), lambda i, j: (j, 0, 0)),      # down tile
            ],
            out_specs=pl.BlockSpec((tm, dim), lambda i, j: (i, 0)),
            scratch_shapes=scratch_shapes,
        ),
        compiler_params=pltpu.CompilerParams(
            dimension_semantics=("parallel", "arbitrary"),
            vmem_limit_bytes=vmem_limit,
        ),
        cost_estimate=cost,
        interpret=interpret,
    )(x2d, wgu, wdt)

    if Mp != M:
        out = out[:M]
    return out.reshape(orig_shape)


# ------------------------------- reference -----------------------------------

def glu_mlp_ref(x, wg, wu, wd, compute_dtype=jnp.float32):
    """Pure-JAX reference matching the kernel's dtype behavior."""
    xc = x.astype(compute_dtype)
    gate = jnp.dot(xc, wg.T.astype(compute_dtype), preferred_element_type=jnp.float32)
    up = jnp.dot(xc, wu.T.astype(compute_dtype), preferred_element_type=jnp.float32)
    h = ((gate * jax.nn.sigmoid(gate)) * up).astype(compute_dtype)
    out = jnp.dot(h, wd.T.astype(compute_dtype), preferred_element_type=jnp.float32)
    return out.astype(x.dtype)


# ---------------------------------- test --------------------------------------

if __name__ == "__main__":
    batch, seq, dim, hidden = 2, 8, 32, 64

    key = jax.random.PRNGKey(0)
    kx, kg, ku, kd = jax.random.split(key, 4)

    x = jax.random.normal(kx, (batch, seq, dim), dtype=jnp.float32)
    # torch nn.Linear weight layouts: (out_features, in_features)
    wg = jax.random.normal(kg, (hidden, dim), dtype=jnp.float32) * dim ** -0.5
    wu = jax.random.normal(ku, (hidden, dim), dtype=jnp.float32) * dim ** -0.5
    wd = jax.random.normal(kd, (dim, hidden), dtype=jnp.float32) * hidden ** -0.5

    compute_dtype = jnp.bfloat16
    th = pick_hidden_tile(dim, hidden, compute_dtype=compute_dtype,
                          x_dtype=x.dtype, out_dtype=x.dtype)
    wgu, wdt = prepare_glu_mlp_weights(wg, wu, wd, th=th, compute_dtype=compute_dtype)

    out = glu_mlp(x, wgu, wdt)
    out = jax.block_until_ready(out)

    ref = glu_mlp_ref(x, wg, wu, wd, compute_dtype=compute_dtype)

    assert out.shape == ref.shape == (batch, seq, dim)
    max_err = float(jnp.max(jnp.abs(out - ref)))
    assert jnp.allclose(out, ref, atol=2e-2, rtol=2e-2), f"max abs err {max_err}"
    print("KERNEL_OK")
</pallas_src>

<mosaic_0001>
module attributes {stable_mosaic.version = 11 : i64} {
  func.func @_glu_mlp_kernel(%arg0: i32, %arg1: i32, %arg2: memref<16x32xf32, #tpu.memory_space<vmem>>, %arg3: memref<1x32x128xbf16, #tpu.memory_space<vmem>>, %arg4: memref<1x64x32xbf16, #tpu.memory_space<vmem>>, %arg5: memref<16x32xf32, #tpu.memory_space<vmem>>) attributes {dimension_semantics = [#tpu.dimension_semantics<parallel>, #tpu.dimension_semantics<arbitrary>], iteration_bounds = array<i64: 1, 1>, scalar_prefetch = 0 : i64, scratch_operands = 0 : i64, tpu.core_type = #tpu.core_type<tc>, window_params = [{transform_indices = @transform_0, window_bounds = array<i64: 16, 32>}, {transform_indices = @transform_1, window_bounds = array<i64: 1, 32, 128>}, {transform_indices = @transform_2, window_bounds = array<i64: 1, 64, 32>}, {transform_indices = @transform_3, window_bounds = array<i64: 16, 32>}]} {
    %c0 = arith.constant 0 : index
    %c0_0 = arith.constant 0 : index
    %0 = vector.load %arg2[%c0, %c0_0] : memref<16x32xf32, #tpu.memory_space<vmem>>, vector<16x32xf32>
    %1 = arith.truncf %0 : vector<16x32xf32> to vector<16x32xbf16>
    %c0_1 = arith.constant 0 : index
    %c0_2 = arith.constant 0 : index
    %c0_3 = arith.constant 0 : index
    %2 = vector.load %arg3[%c0_1, %c0_2, %c0_3] : memref<1x32x128xbf16, #tpu.memory_space<vmem>>, vector<1x32x128xbf16>
    %3 = vector.shape_cast %2 : vector<1x32x128xbf16> to vector<32x128xbf16>
    %cst = arith.constant dense<0.000000e+00> : vector<16x128xf32>
    %4 = tpu.matmul %1, %3, %cst {dimension_numbers = #tpu.dot_dimension_numbers<[1], [0], [0], [1], [0, 0, 1, 1], [], []>} : vector<16x32xbf16>, vector<32x128xbf16>, vector<16x128xf32> -> vector<16x128xf32>
    %5 = vector.extract_strided_slice %4 {offsets = [0, 0], sizes = [16, 64], strides = [1, 1]} : vector<16x128xf32> to vector<16x64xf32>
    %6 = vector.extract_strided_slice %4 {offsets = [0, 64], sizes = [16, 64], strides = [1, 1]} : vector<16x128xf32> to vector<16x64xf32>
    %7 = arith.negf %5 : vector<16x64xf32>
    %8 = math.exp %7 : vector<16x64xf32>
    %cst_4 = arith.constant 1.000000e+00 : f32
    %9 = vector.broadcast %cst_4 : f32 to vector<16x64xf32>
    %10 = arith.addf %9, %8 : vector<16x64xf32>
    %11 = arith.divf %9, %10 : vector<16x64xf32>
    %12 = arith.mulf %5, %11 : vector<16x64xf32>
    %13 = arith.mulf %12, %6 : vector<16x64xf32>
    %14 = arith.truncf %13 : vector<16x64xf32> to vector<16x64xbf16>
    %c0_5 = arith.constant 0 : index
    %c0_6 = arith.constant 0 : index
    %c0_7 = arith.constant 0 : index
    %15 = vector.load %arg4[%c0_5, %c0_6, %c0_7] : memref<1x64x32xbf16, #tpu.memory_space<vmem>>, vector<1x64x32xbf16>
    %16 = vector.shape_cast %15 : vector<1x64x32xbf16> to vector<64x32xbf16>
    %cst_8 = arith.constant dense<0.000000e+00> : vector<16x32xf32>
    %17 = tpu.matmul %14, %16, %cst_8 {dimension_numbers = #tpu.dot_dimension_numbers<[1], [0], [0], [1], [0, 0, 1, 1], [], []>} : vector<16x64xbf16>, vector<64x32xbf16>, vector<16x32xf32> -> vector<16x32xf32>
    %c0_9 = arith.constant 0 : index
    %c0_10 = arith.constant 0 : index
    %18 = vector.load %arg5[%c0_9, %c0_10] : memref<16x32xf32, #tpu.memory_space<vmem>>, vector<16x32xf32>
    tpu.vector_store %arg5[%c0_9, %c0_10], %17 {strides = array<i32>} : memref<16x32xf32, #tpu.memory_space<vmem>>, vector<16x32xf32>,
    return
  }
  func.func @transform_0(%arg0: i32, %arg1: i32) -> (i32, i32) {
    %c0_i32 = arith.constant 0 : i32
    %c0_i32_0 = arith.constant 0 : i32
    return %arg0, %c0_i32 : i32, i32
  }
  func.func @transform_1(%arg0: i32, %arg1: i32) -> (i32, i32, i32) {
    %c0_i32 = arith.constant 0 : i32
    %c0_i32_0 = arith.constant 0 : i32
    %c0_i32_1 = arith.constant 0 : i32
    return %arg1, %c0_i32, %c0_i32_0 : i32, i32, i32
  }
  func.func @transform_2(%arg0: i32, %arg1: i32) -> (i32, i32, i32) {
    %c0_i32 = arith.constant 0 : i32
    %c0_i32_0 = arith.constant 0 : i32
    %c0_i32_1 = arith.constant 0 : i32
    return %arg1, %c0_i32, %c0_i32_0 : i32, i32, i32
  }
  func.func @transform_3(%arg0: i32, %arg1: i32) -> (i32, i32) {
    %c0_i32 = arith.constant 0 : i32
    %c0_i32_0 = arith.constant 0 : i32
    return %arg0, %c0_i32 : i32, i32
  }
}

</mosaic_0001>

<llo_original>
// kernel: tpu_custom_call.1
$region0: #{tpu_custom_call.1}
  #allocation0 [shape = 'u32[]', space=smem, size = 0x4, offset = 0x4, fixed_abs, tag = 'smem constant byte address 0x4 - core index']
  #allocation1 [shape = 'u32[144,128]{1,0:T(1,128)}', space=vmem, size = 0x12000, scoped, tag = 'internal scratch']
  %s0 = inlined_call_operand.vmem [shape: f32[16,32], index: 0, kind: input, shape index: {}]
  %s1 = inlined_call_operand.vmem [shape: bf16[1,32,128], index: 1, kind: input, shape index: {}]
  %s2 = inlined_call_operand.vmem [shape: bf16[1,64,32], index: 2, kind: input, shape index: {}]
  %s3 = inlined_call_operand.hbm [shape: f32[16,32], index: 3, kind: output, shape index: {}]
  %s4 = sld [smem:[#allocation0]]
  $region22: #{tpu_custom_call.1} parent=0
    _
  %s6 = ssub.s32 1, %s4
  %s7 = scalar_select 0, %s6, %s4
  $region1: #{tpu_custom_call.1} parent=0
    #allocation2 [shape = 'u8[8192]{0}', space=vmem, size = 0x2000, scoped, tag = 'output window, operand 0, single buffered']
    #allocation3 [shape = 's32[1]{0}', space=sflag, size = 0x4, scoped, tag = 'scoped memory for tpu_custom_call.1']
    %8 = vsyncpa [#allocation3], 0
    // Predicated region
    $region2: #{tpu_custom_call.1} parent=1 // pred_check
      _
    $region3: #{tpu_custom_call.1} parent=1 // pred_check_branch
      %10 = sbr.rel (0) target = $region5
    $region4: #{tpu_custom_call.1} parent=1 // pred_region
      _
    $region5: #{tpu_custom_call.1} parent=1 // pred_fallthru
      _
    // Predicated region
    $region6: #{tpu_custom_call.1} parent=1 // pred_check
      _
    $region7: #{tpu_custom_call.1} parent=1 // pred_check_branch
      %12 = sbr.rel (0) target = $region9
    $region8: #{tpu_custom_call.1} parent=1 // pred_region
      _
    $region9: #{tpu_custom_call.1} parent=1 // pred_fallthru
      _
    // Predicated region
    $region10: #{tpu_custom_call.1} parent=1 // pred_check
      _
    $region11: #{tpu_custom_call.1} parent=1 // pred_check_branch
      %14 = sbr.rel (0) target = $region13
    $region12: #{tpu_custom_call.1} parent=1 // pred_region
      _
    $region13: #{tpu_custom_call.1} parent=1 // pred_fallthru
      _
    %v16 = vld [vmem:[%s0] sm:$0xff]
    %v17 = vld [vmem:[%s0 + $0x8] sm:$0xff]
    %v18 = vpack.c.bf16 %v17, %v16
    %v19 = vld [vmem:[%s1] sm:$0xf]
    %v20 = vld [vmem:[%s1 + $0x4] sm:$0xf]
    %v21 = vld [vmem:[%s1 + $0x8] sm:$0xf]
    %v22 = vld [vmem:[%s1 + $0xc] sm:$0xf]
    %v27 = vunpack.c.l.b16 %v19
    %v28 = vunpack.c.l.b16 %v20
    %v29 = vunpack.c.l.b16 %v21
    %v30 = vunpack.c.l.b16 %v22
    %v31 = vpack.c.b16 %v28, %v27
    %v32 = vpack.c.b16 %v30, %v29
    %vm35 = vcmask 261120
    %v37 = vsel %vm35, %v18, 0
    %39 = vmatprep.subr.bf16.mxu0 0
    %40 = vmatpush1.bf16.msra.mxu0 %v31
    %41 = vmatprep.subr.bf16.mxu0 0
    %42 = vmatpush1.bf16.msra.mxu0 %v32
    %43 = vmatprep.subr.bf16.mxu0 0
    %44 = vmatpush1.bf16.msra.mxu0 0
    %45 = vmatprep.subr.bf16.mxu0 0
    %46 = vmatpush1.bf16.msra.mxu0 0
    %47 = vmatprep.subr.bf16.mxu0 0
    %48 = vmatpush1.bf16.msra.mxu0 0
    %49 = vmatprep.subr.bf16.mxu0 0
    %50 = vmatpush1.bf16.msra.mxu0 0
    %51 = vmatprep.subr.bf16.mxu0 0
    %52 = vmatpush1.bf16.msra.mxu0 0
    %53 = vmatprep.subr.bf16.mxu0 0
    %54 = vmatpush1.bf16.msra.mxu0 0
    %55 = vmatprep.subr.bf16.mxu0 0
    %56 = vmatpush1.bf16.msra.mxu0 0
    %57 = vmatprep.subr.bf16.mxu0 0
    %58 = vmatpush1.bf16.msra.mxu0 0
    %59 = vmatprep.subr.bf16.mxu0 0
    %60 = vmatpush1.bf16.msra.mxu0 0
    %61 = vmatprep.subr.bf16.mxu0 0
    %62 = vmatpush1.bf16.msra.mxu0 0
    %63 = vmatprep.subr.bf16.mxu0 0
    %64 = vmatpush1.bf16.msra.mxu0 0
    %65 = vmatprep.subr.bf16.mxu0 0
    %66 = vmatpush1.bf16.msra.mxu0 0
    %67 = vmatprep.subr.bf16.mxu0 0
    %68 = vmatpush1.bf16.msra.mxu0 0
    %69 = vmatprep.subr.bf16.mxu0 0
    %70 = vmatpush1.bf16.msra.mxu0 0
    %71 = vmatprep.mubr.bf16.mxu0 0
    %72 = vmatmul.mubr.bf16.gmra.mrb[0].mxu0 %v37
    %v73 = vpop.f32.mrb[0].mxu0
    %v74 = vadd.f32 0.0, %v73
    %v75 = vpop.f32.mrb[0].mxu0
    %v76 = vpop.f32.mrb[0].mxu0
    %v77 = vadd.f32 0.0, %v76
    %v78 = vpop.f32.mrb[0].mxu0
    %79 = vdwg.mxu0
    %v80 = vxor.u32 %v74, 2147483648
    %v81 = vxor.u32 %v77, 2147483648
    %v82 = vmul.f32 %v80, 1.442695
    %v83 = vpow.pop %v82
    %v84 = vmul.f32 %v81, 1.442695
    %v85 = vpow.pop %v84
    %v86 = vadd.f32 %v83, 1.0
    %v87 = vadd.f32 %v85, 1.0
    %v88 = vrcp.pop %v86
    %v89 = vmul.f32 1.0, %v88
    %v90 = vrcp.pop %v87
    %v91 = vmul.f32 1.0, %v90
    %v92 = vmul.f32 %v74, %v89
    %v93 = vmul.f32 %v77, %v91
    %96 = vrot.lane.b32.xlu0 %v74, 64
    %v97 = vpop.permute.xlu0 %96
    %98 = vrot.lane.b32.xlu0 %v77, 64
    %v99 = vpop.permute.xlu0 %98
    %v102 = vmul.f32 %v92, %v97
    %v103 = vmul.f32 %v93, %v99
    %v104 = vpack.c.bf16 %v103, %v102
    %v105 = vld [vmem:[%s2] sm:$0xf]
    %v106 = vld [vmem:[%s2 + $0x4] sm:$0xf]
    %v107 = vld [vmem:[%s2 + $0x8] sm:$0xf]
    %v108 = vld [vmem:[%s2 + $0xc] sm:$0xf]
    %v109 = vld [vmem:[%s2 + $0x10] sm:$0xf]
    %v110 = vld [vmem:[%s2 + $0x14] sm:$0xf]
    %v111 = vld [vmem:[%s2 + $0x18] sm:$0xf]
    %v112 = vld [vmem:[%s2 + $0x1c] sm:$0xf]
    %v121 = vunpack.c.l.b16 %v105
    %v122 = vunpack.c.l.b16 %v106
    %v123 = vunpack.c.l.b16 %v107
    %v124 = vunpack.c.l.b16 %v108
    %v125 = vunpack.c.l.b16 %v109
    %v126 = vunpack.c.l.b16 %v110
    %v127 = vunpack.c.l.b16 %v111
    %v128 = vunpack.c.l.b16 %v112
    %v129 = vpack.c.b16 %v122, %v121
    %v130 = vpack.c.b16 %v124, %v123
    %v131 = vpack.c.b16 %v126, %v125
    %v132 = vpack.c.b16 %v128, %v127
    %vm137 = vcmask 523264
    %v139 = vsel %vm137, %v104, 0
    %141 = vmatprep.subr.bf16.mxu0 0
    %142 = vmatpush1.bf16.msra.mxu0 %v129
    %143 = vmatprep.subr.bf16.mxu0 0
    %144 = vmatpush1.bf16.msra.mxu0 %v130
    %145 = vmatprep.subr.bf16.mxu0 0
    %146 = vmatpush1.bf16.msra.mxu0 %v131
    %147 = vmatprep.subr.bf16.mxu0 0
    %148 = vmatpush1.bf16.msra.mxu0 %v132
    %149 = vmatprep.subr.bf16.mxu0 0
    %150 = vmatpush1.bf16.msra.mxu0 0
    %151 = vmatprep.subr.bf16.mxu0 0
    %152 = vmatpush1.bf16.msra.mxu0 0
    %153 = vmatprep.subr.bf16.mxu0 0
    %154 = vmatpush1.bf16.msra.mxu0 0
    %155 = vmatprep.subr.bf16.mxu0 0
    %156 = vmatpush1.bf16.msra.mxu0 0
    %157 = vmatprep.subr.bf16.mxu0 0
    %158 = vmatpush1.bf16.msra.mxu0 0
    %159 = vmatprep.subr.bf16.mxu0 0
    %160 = vmatpush1.bf16.msra.mxu0 0
    %161 = vmatprep.subr.bf16.mxu0 0
    %162 = vmatpush1.bf16.msra.mxu0 0
    %163 = vmatprep.subr.bf16.mxu0 0
    %164 = vmatpush1.bf16.msra.mxu0 0
    %165 = vmatprep.subr.bf16.mxu0 0
    %166 = vmatpush1.bf16.msra.mxu0 0
    %167 = vmatprep.subr.bf16.mxu0 0
    %168 = vmatpush1.bf16.msra.mxu0 0
    %169 = vmatprep.subr.bf16.mxu0 0
    %170 = vmatpush1.bf16.msra.mxu0 0
    %171 = vmatprep.subr.bf16.mxu0 0
    %172 = vmatpush1.bf16.msra.mxu0 0
    %173 = vmatprep.mubr.bf16.mxu0 0
    %174 = vmatmul.mubr.bf16.gmra.mrb[0].mxu0 %v139
    %v175 = vpop.f32.mrb[0].mxu0
    %v176 = vadd.f32 0.0, %v175
    %v177 = vpop.f32.mrb[0].mxu0
    %v178 = vpop.f32.mrb[0].mxu0
    %v179 = vadd.f32 0.0, %v178
    %v180 = vpop.f32.mrb[0].mxu0
    %181 = vdwg.mxu0
    %182 = vst.msk [vmem:[#allocation2] sm:$0xff] %vm35, %v176
    %183 = vst.msk [vmem:[#allocation2 + $0x8] sm:$0xff] %vm35, %v179
    // Predicated region
    $region14: #{tpu_custom_call.1} parent=1 // pred_check
      _
    $region15: #{tpu_custom_call.1} parent=1 // pred_check_branch
      %185 = sbr.rel (0) target = $region17
    $region16: #{tpu_custom_call.1} parent=1 // pred_region
      %s187 = ssub.s32 256, 256
      %188 = vsyncadd [#allocation3], %s187
      %s189 = sshll.u32 [#allocation2], 4
      %s190 = int_to_ptr.vmem [resolvable:$true] %s189
      %195 = dma.vmem_to_hbm [thread:$0]  %s190, 256, %s3, [#allocation3], 128, 128, 8
    $region17: #{tpu_custom_call.1} parent=1 // pred_fallthru
      _
    // Predicated region
    $region18: #{tpu_custom_call.1} parent=1 // pred_check
      _
    $region19: #{tpu_custom_call.1} parent=1 // pred_check_branch
      %197 = sbr.rel (0) target = $region21
    $region20: #{tpu_custom_call.1} parent=1 // pred_region
      %198 = dma.done [#allocation3], 256
    $region21: #{tpu_custom_call.1} parent=1 // pred_fallthru
      _
    %199 = vsyncpa [#allocation3], 1

</llo_original>
